<compile_context>
chip_gen: v7x
topology: tpu7x:2x2x1
jax: 0.10.0
libtpu: 0.0.40
codegen_flags: <defaults>
</compile_context>

<pallas_src>
import functools
import math

import jax
import jax.numpy as jnp
from jax.experimental import pallas as pl
from jax.experimental.pallas import tpu as pltpu

# ---------------- configuration (small synthetic shapes) ----------------
B                   = 2    # batch
NUM_NODES           = 16   # N
DAILY_WINDOW        = 8    # T
DIM_ENC_HIDDEN      = 32   # H
DIM_K               = 16
DIM_V               = 16
NUM_HEADS           = 2
DIM_SHORT_HIDDEN    = 32   # Ds
NUM_CLUSTERS        = 4    # C
DIM_GCN_HIDDEN      = 32   # Dg
DIM_CLUSTERS_HIDDEN = 32   # Dc
DIM_CLUSTER_EMB     = 8    # embedding dim for adaptive cluster graph
DIM_OUT             = DIM_SHORT_HIDDEN + DIM_CLUSTERS_HIDDEN

DKH = DIM_K // NUM_HEADS
DVH = DIM_V // NUM_HEADS


def _round_up(n, m):
    return -(-n // m) * m


def pack_weights(entries, *, lane_width=128, row_align=8, col_align=8,
                 dtype=jnp.bfloat16):
    """Greedy 2-D shelf packing of 2-D weight sections into ONE lane-dense
    (rows, lane_width) bf16 blob, so no vreg lanes are wasted on padding and a
    single DMA brings every weight into VMEM.

    Returns (blob, offsets) with offsets[name] = (row0, col0, rows, cols) as
    static Python ints; the kernel slices its sub-blocks with static indices."""
    items = sorted(entries, key=lambda kv: (-kv[1].shape[0], -kv[1].shape[1]))
    shelves = []                    # each: [row0, shelf_height, next_free_col]
    offsets = {}
    next_row = 0
    for name, a in items:
        nr, nc = int(a.shape[0]), int(a.shape[1])
        assert nc <= lane_width, name
        placed = False
        for s in shelves:
            if nr <= s[1] and s[2] + nc <= lane_width:
                offsets[name] = (s[0], s[2], nr, nc)
                s[2] = _round_up(s[2] + nc, col_align)
                placed = True
                break
        if not placed:
            h = _round_up(nr, row_align)
            offsets[name] = (next_row, 0, nr, nc)
            shelves.append([next_row, h, _round_up(nc, col_align)])
            next_row += h
    rows = _round_up(max(next_row, row_align), 16)    # bf16 packs 16 sublanes
    blob = jnp.zeros((rows, lane_width), dtype)
    for name, a in entries:
        r0, c0, nr, nc = offsets[name]
        blob = blob.at[r0:r0 + nr, c0:c0 + nc].set(a.astype(dtype))
    return blob, offsets


def raa_kernel(x_ref, w_ref, out_ref, *, off):
    """One grid step = one batch element.  x_ref: (N, T) bf16, w_ref: packed
    bf16 weight blob, out_ref: (N, DIM_OUT) f32."""
    f32 = jnp.float32
    bf16 = jnp.bfloat16

    def W(name):                       # static (sublane, lane) block of the blob
        r0, c0, nr, nc = off[name]
        return w_ref[r0:r0 + nr, c0:c0 + nc]

    x = x_ref[...]                                                   # (N, T) bf16

    # ---- TimeEncoder: relu(x @ W_enc + b_enc) ----
    h = jnp.maximum(
        jnp.dot(x, W("enc_w"), preferred_element_type=f32)
        + W("enc_b").astype(f32), 0.0)                               # (N, H) f32

    # ---- fused QKV projection: one MXU push; columns are ordered head-major
    #      [q_h | k_h | v_h] per head so per-head operands are static lane slices
    qkv = jnp.dot(h.astype(bf16), W("wqkv"),
                  preferred_element_type=f32).astype(bf16)           # (N, 2K+V)

    per_head = 2 * DKH + DVH
    scale = 1.0 / math.sqrt(DKH)

    # ---- multi-head attention over nodes: all heads batched in one einsum pair
    #      (leading head axis), softmax/exp kept in f32 for v5e compatibility ----
    q = jnp.stack([qkv[:, hd * per_head:hd * per_head + DKH]
                   for hd in range(NUM_HEADS)])                      # (nh, N, dkh)
    k = jnp.stack([qkv[:, hd * per_head + DKH:hd * per_head + 2 * DKH]
                   for hd in range(NUM_HEADS)])                      # (nh, N, dkh)
    v = jnp.stack([qkv[:, hd * per_head + 2 * DKH:(hd + 1) * per_head]
                   for hd in range(NUM_HEADS)])                      # (nh, N, dvh)
    s = jnp.einsum('hqd,hkd->hqk', q, k,
                   preferred_element_type=f32) * scale               # (nh, N, N)
    s = s - jnp.max(s, axis=-1, keepdims=True)
    e = jnp.exp(s)
    p = (e / jnp.sum(e, axis=-1, keepdims=True)).astype(bf16)        # exact softmax
    ctx = jnp.einsum('hqk,hkd->hqd', p, v,
                     preferred_element_type=f32)                     # (nh, N, dvh)

    # ---- fc_short distributed over heads (no lane-axis concat of heads) ----
    y_sh = W("fcs_b").astype(f32)
    for hd in range(NUM_HEADS):
        y_sh = y_sh + jnp.dot(ctx[hd].astype(bf16), W(f"fcs_w{hd}"),
                              preferred_element_type=f32)
    y_sh = jnp.maximum(y_sh, 0.0)                                    # (N, Ds)

    # ---- cluster branch: pool -> GCN linear -> unpool -> fc_clusters ----
    # pool = clusters_G @ soft_clusters (C, N), unpool = soft_clusters^T (N, C);
    # plain 2-D matmuls per batch element => total cost is O(B), not O(B^2).
    y_sh_b = y_sh.astype(bf16)
    gx = jnp.dot(W("pool"), y_sh_b, preferred_element_type=f32)      # (C, Ds)
    gc = jnp.maximum(
        jnp.dot(gx.astype(bf16), W("gcn_w"), preferred_element_type=f32)
        + W("gcn_b").astype(f32), 0.0)                               # (C, Dg)
    y_ch = jnp.dot(W("unpool"), gc.astype(bf16),
                   preferred_element_type=f32)                       # (N, Dg)
    y_cl = jnp.maximum(
        jnp.dot(y_ch.astype(bf16), W("fcc_w"), preferred_element_type=f32)
        + W("fcc_b").astype(f32), 0.0)                               # (N, Dc)

    # ---- two direct slice stores (no concatenated temporary).
    # DIM_OUT = 64 < 128 lanes => masked stores; fine at this size (widen / repack
    # the output slab lane-dense only if DIM_OUT grows).
    out_ref[:, 0:DIM_SHORT_HIDDEN] = y_sh
    out_ref[:, DIM_SHORT_HIDDEN:DIM_OUT] = y_cl


def raa_forward(x, params):
    """x: (B, N, T) float32. Returns (y_short_out, soft_clusters, clusters_G)."""
    Bn, N, T = x.shape
    assert (Bn, N, T) == (B, NUM_NODES, DAILY_WINDOW)

    soft_clusters = params["soft_clusters"]                          # (C, N)
    cluster_emb   = params["cluster_emb"]                            # (C, E)

    # Adaptive cluster graph (tiny CxC, batch-independent) -- plain-JAX glue.
    clusters_G = jax.nn.softmax(
        jnp.maximum(cluster_emb @ cluster_emb.T, 0.0), axis=-1)      # (C, C)

    # Fold the cluster graph into the pooling matrix.  Pool stays (C, N) and
    # unpool stays (N, C): no kron / block-diagonal O(B^2) growth.
    pool = clusters_G @ soft_clusters                                # (C, N)
    unpool = soft_clusters.T                                         # (N, C)

    # Fused QKV weight, ordered head-major: [q_h | k_h | v_h] per head.
    cols = []
    for hd in range(NUM_HEADS):
        cols += [params["wq"][:, hd * DKH:(hd + 1) * DKH],
                 params["wk"][:, hd * DKH:(hd + 1) * DKH],
                 params["wv"][:, hd * DVH:(hd + 1) * DVH]]
    wqkv = jnp.concatenate(cols, axis=1)                             # (H, 2K+V)

    entries = [
        ("enc_w", params["enc_w"]), ("enc_b", params["enc_b"]),
        ("wqkv", wqkv),
        ("fcs_b", params["fcs_b"]),
        ("pool", pool), ("unpool", unpool),
        ("gcn_w", params["gcn_w"]), ("gcn_b", params["gcn_b"]),
        ("fcc_w", params["fcc_w"]), ("fcc_b", params["fcc_b"]),
    ]
    for hd in range(NUM_HEADS):                       # per-head fc_short slabs
        entries.append((f"fcs_w{hd}",
                        params["fcs_w"][hd * DVH:(hd + 1) * DVH, :]))

    blob, off = pack_weights(entries)                 # lane-dense bf16 blob

    x_b = x.astype(jnp.bfloat16)

    out = pl.pallas_call(
        functools.partial(raa_kernel, off=off),
        out_shape=jax.ShapeDtypeStruct((B, NUM_NODES, DIM_OUT), jnp.float32),
        grid=(B,),                                    # real parallel axis over B
        in_specs=[
            pl.BlockSpec((None, NUM_NODES, DAILY_WINDOW), lambda b: (b, 0, 0)),
            pl.BlockSpec(blob.shape, lambda b: (0, 0)),   # constant block: 1 DMA
        ],
        out_specs=pl.BlockSpec((None, NUM_NODES, DIM_OUT), lambda b: (b, 0, 0)),
        compiler_params=pltpu.CompilerParams(
            dimension_semantics=("parallel",)),       # lets v7x use both TCs
    )(x_b, blob)

    return out, soft_clusters, clusters_G


def raa_reference(x, params):
    """Pure-JAX f32 reference of the documented RAA semantics."""
    sc = params["soft_clusters"]
    ce = params["cluster_emb"]
    clusters_G = jax.nn.softmax(jnp.maximum(ce @ ce.T, 0.0), axis=-1)

    h = jax.nn.relu(jnp.einsum('bnt,th->bnh', x, params["enc_w"])
                    + params["enc_b"])
    q = h @ params["wq"]; k = h @ params["wk"]; v = h @ params["wv"]
    heads = []
    for hd in range(NUM_HEADS):
        qh = q[..., hd * DKH:(hd + 1) * DKH]
        kh = k[..., hd * DKH:(hd + 1) * DKH]
        vh = v[..., hd * DVH:(hd + 1) * DVH]
        s = jnp.einsum('bqd,bkd->bqk', qh, kh) / math.sqrt(DKH)
        p = jax.nn.softmax(s, axis=-1)
        heads.append(jnp.einsum('bqk,bkd->bqd', p, vh))
    att = jnp.concatenate(heads, axis=-1)                            # (B, N, V)
    y_sh = jax.nn.relu(att @ params["fcs_w"] + params["fcs_b"])
    pooled = jnp.einsum('cn,bnd->bcd', sc, y_sh)
    gcn_in = jnp.einsum('ck,bkd->bcd', clusters_G, pooled)
    gc = jax.nn.relu(gcn_in @ params["gcn_w"] + params["gcn_b"])
    y_ch = jnp.einsum('cn,bcd->bnd', sc, gc)
    y_cl = jax.nn.relu(y_ch @ params["fcc_w"] + params["fcc_b"])
    return jnp.concatenate([y_sh, y_cl], axis=-1), sc, clusters_G


def init_params(key):
    keys = jax.random.split(key, 16)
    nrm = lambda k, shape: (0.1 * jax.random.normal(k, shape)).astype(jnp.float32)
    return {
        "soft_clusters": nrm(keys[0], (NUM_CLUSTERS, NUM_NODES)),
        "cluster_emb":   nrm(keys[1], (NUM_CLUSTERS, DIM_CLUSTER_EMB)),
        "enc_w": nrm(keys[2], (DAILY_WINDOW, DIM_ENC_HIDDEN)),
        "enc_b": nrm(keys[3], (1, DIM_ENC_HIDDEN)),
        "wq":    nrm(keys[4], (DIM_ENC_HIDDEN, DIM_K)),
        "wk":    nrm(keys[5], (DIM_ENC_HIDDEN, DIM_K)),
        "wv":    nrm(keys[6], (DIM_ENC_HIDDEN, DIM_V)),
        "fcs_w": nrm(keys[7], (DIM_V, DIM_SHORT_HIDDEN)),
        "fcs_b": nrm(keys[8], (1, DIM_SHORT_HIDDEN)),
        "gcn_w": nrm(keys[9], (DIM_SHORT_HIDDEN, DIM_GCN_HIDDEN)),
        "gcn_b": nrm(keys[10], (1, DIM_GCN_HIDDEN)),
        "fcc_w": nrm(keys[11], (DIM_GCN_HIDDEN, DIM_CLUSTERS_HIDDEN)),
        "fcc_b": nrm(keys[12], (1, DIM_CLUSTERS_HIDDEN)),
    }


if __name__ == "__main__":
    key = jax.random.PRNGKey(0)
    k_x, k_p = jax.random.split(key)
    params = init_params(k_p)
    x = jax.random.normal(k_x, (B, NUM_NODES, DAILY_WINDOW), dtype=jnp.float32)

    y_short_out, soft_clusters, clusters_G = raa_forward(x, params)
    jax.block_until_ready((y_short_out, soft_clusters, clusters_G))

    assert y_short_out.shape == (B, NUM_NODES, DIM_OUT)
    assert soft_clusters.shape == (NUM_CLUSTERS, NUM_NODES)
    assert clusters_G.shape == (NUM_CLUSTERS, NUM_CLUSTERS)
    assert bool(jnp.all(jnp.isfinite(y_short_out)))

    # Functional sanity check against a pure-JAX f32 reference; the tolerance is
    # generous to absorb the bf16 weight/activation quantization in the kernel.
    y_ref, _, _ = raa_reference(x, params)
    max_err = float(jnp.max(jnp.abs(y_short_out - y_ref)))
    assert max_err < 5e-2, f"max |kernel - reference| = {max_err}"

    print("KERNEL_OK")
</pallas_src>

<mosaic_0001>
module attributes {stable_mosaic.version = 11 : i64} {
  func.func @raa_kernel(%arg0: i32, %arg1: memref<1x16x8xbf16, #tpu.memory_space<vmem>>, %arg2: memref<48x128xbf16, #tpu.memory_space<vmem>>, %arg3: memref<1x16x64xf32, #tpu.memory_space<vmem>>) attributes {dimension_semantics = [#tpu.dimension_semantics<parallel>], iteration_bounds = array<i64: 2>, scalar_prefetch = 0 : i64, scratch_operands = 0 : i64, tpu.core_type = #tpu.core_type<tc>, window_params = [{transform_indices = @transform_0, window_bounds = array<i64: 1, 16, 8>}, {pipeline_mode = #tpu.pipeline_mode<synchronous>, transform_indices = @transform_1, window_bounds = array<i64: 48, 128>}, {transform_indices = @transform_2, window_bounds = array<i64: 1, 16, 64>}]} {
    %c0 = arith.constant 0 : index
    %c0_0 = arith.constant 0 : index
    %c0_1 = arith.constant 0 : index
    %0 = vector.load %arg1[%c0, %c0_0, %c0_1] : memref<1x16x8xbf16, #tpu.memory_space<vmem>>, vector<1x16x8xbf16>
    %1 = vector.shape_cast %0 : vector<1x16x8xbf16> to vector<16x8xbf16>
    %c32 = arith.constant 32 : index
    %c0_2 = arith.constant 0 : index
    %2 = vector.load %arg2[%c32, %c0_2] : memref<48x128xbf16, #tpu.memory_space<vmem>>, vector<8x32xbf16>
    %cst = arith.constant dense<0.000000e+00> : vector<16x32xf32>
    %3 = tpu.matmul %1, %2, %cst {dimension_numbers = #tpu.dot_dimension_numbers<[1], [0], [0], [1], [0, 0, 1, 1], [], []>} : vector<16x8xbf16>, vector<8x32xbf16>, vector<16x32xf32> -> vector<16x32xf32>
    %c40 = arith.constant 40 : index
    %c0_3 = arith.constant 0 : index
    %4 = vector.load %arg2[%c40, %c0_3] : memref<48x128xbf16, #tpu.memory_space<vmem>>, vector<1x32xbf16>
    %5 = arith.extf %4 : vector<1x32xbf16> to vector<1x32xf32>
    %6 = vector.broadcast %5 : vector<1x32xf32> to vector<16x32xf32>
    %7 = arith.addf %3, %6 : vector<16x32xf32>
    %cst_4 = arith.constant 0.000000e+00 : f32
    %8 = vector.broadcast %cst_4 : f32 to vector<16x32xf32>
    %9 = arith.maximumf %7, %8 : vector<16x32xf32>
    %10 = arith.truncf %9 : vector<16x32xf32> to vector<16x32xbf16>
    %c0_5 = arith.constant 0 : index
    %c0_6 = arith.constant 0 : index
    %11 = vector.load %arg2[%c0_5, %c0_6] : memref<48x128xbf16, #tpu.memory_space<vmem>>, vector<32x48xbf16>
    %cst_7 = arith.constant dense<0.000000e+00> : vector<16x48xf32>
    %12 = tpu.matmul %10, %11, %cst_7 {dimension_numbers = #tpu.dot_dimension_numbers<[1], [0], [0], [1], [0, 0, 1, 1], [], []>} : vector<16x32xbf16>, vector<32x48xbf16>, vector<16x48xf32> -> vector<16x48xf32>
    %13 = arith.truncf %12 : vector<16x48xf32> to vector<16x48xbf16>
    %14 = vector.extract_strided_slice %13 {offsets = [0, 0], sizes = [16, 8], strides = [1, 1]} : vector<16x48xbf16> to vector<16x8xbf16>
    %15 = vector.extract_strided_slice %13 {offsets = [0, 24], sizes = [16, 8], strides = [1, 1]} : vector<16x48xbf16> to vector<16x8xbf16>
    %16 = vector.shape_cast %14 : vector<16x8xbf16> to vector<1x16x8xbf16>
    %17 = vector.shape_cast %15 : vector<16x8xbf16> to vector<1x16x8xbf16>
    %18 = tpu.concatenate %16, %17 in 0 : vector<1x16x8xbf16>, vector<1x16x8xbf16> -> vector<2x16x8xbf16>
    %19 = vector.extract_strided_slice %13 {offsets = [0, 8], sizes = [16, 8], strides = [1, 1]} : vector<16x48xbf16> to vector<16x8xbf16>
    %20 = vector.extract_strided_slice %13 {offsets = [0, 32], sizes = [16, 8], strides = [1, 1]} : vector<16x48xbf16> to vector<16x8xbf16>
    %21 = vector.shape_cast %19 : vector<16x8xbf16> to vector<1x16x8xbf16>
    %22 = vector.shape_cast %20 : vector<16x8xbf16> to vector<1x16x8xbf16>
    %23 = tpu.concatenate %21, %22 in 0 : vector<1x16x8xbf16>, vector<1x16x8xbf16> -> vector<2x16x8xbf16>
    %24 = vector.extract_strided_slice %13 {offsets = [0, 16], sizes = [16, 8], strides = [1, 1]} : vector<16x48xbf16> to vector<16x8xbf16>
    %25 = vector.extract_strided_slice %13 {offsets = [0, 40], sizes = [16, 8], strides = [1, 1]} : vector<16x48xbf16> to vector<16x8xbf16>
    %26 = vector.shape_cast %24 : vector<16x8xbf16> to vector<1x16x8xbf16>
    %27 = vector.shape_cast %25 : vector<16x8xbf16> to vector<1x16x8xbf16>
    %28 = tpu.concatenate %26, %27 in 0 : vector<1x16x8xbf16>, vector<1x16x8xbf16> -> vector<2x16x8xbf16>
    "tpu.trace_start"() <{level = 10 : i32, message = "hqd,hkd->hqk"}> : () -> ()
    %cst_8 = arith.constant dense<0.000000e+00> : vector<2x16x16xf32>
    %29 = tpu.matmul %18, %23, %cst_8 {dimension_numbers = #tpu.dot_dimension_numbers<[2], [2], [1], [1], [0, 0, 0, 1, 1, 1], [0], [0]>} : vector<2x16x8xbf16>, vector<2x16x8xbf16>, vector<2x16x16xf32> -> vector<2x16x16xf32>
    "tpu.trace_stop"() : () -> ()
    %cst_9 = arith.constant 0.353553385 : f32
    %30 = vector.broadcast %cst_9 : f32 to vector<2x16x16xf32>
    %31 = arith.mulf %29, %30 : vector<2x16x16xf32>
    %cst_10 = arith.constant dense<0xFF800000> : vector<2x16xf32>
    %32 = vector.multi_reduction <maximumf>, %31, %cst_10 [2] : vector<2x16x16xf32> to vector<2x16xf32>
    %33 = vector.shape_cast %32 : vector<2x16xf32> to vector<2x16x1xf32>
    %34 = vector.broadcast %33 : vector<2x16x1xf32> to vector<2x16x16xf32>
    %35 = arith.subf %31, %34 : vector<2x16x16xf32>
    %36 = math.exp %35 : vector<2x16x16xf32>
    %cst_11 = arith.constant dense<0.000000e+00> : vector<2x16xf32>
    %37 = vector.multi_reduction <add>, %36, %cst_11 [2] : vector<2x16x16xf32> to vector<2x16xf32>
    %38 = vector.shape_cast %37 : vector<2x16xf32> to vector<2x16x1xf32>
    %39 = vector.broadcast %38 : vector<2x16x1xf32> to vector<2x16x16xf32>
    %40 = arith.divf %36, %39 : vector<2x16x16xf32>
    %41 = arith.truncf %40 : vector<2x16x16xf32> to vector<2x16x16xbf16>
    "tpu.trace_start"() <{level = 10 : i32, message = "hqk,hkd->hqd"}> : () -> ()
    %cst_12 = arith.constant dense<0.000000e+00> : vector<2x16x8xf32>
    %42 = tpu.matmul %41, %28, %cst_12 {dimension_numbers = #tpu.dot_dimension_numbers<[2], [1], [1], [2], [0, 0, 0, 1, 1, 2], [0], [0]>} : vector<2x16x16xbf16>, vector<2x16x8xbf16>, vector<2x16x8xf32> -> vector<2x16x8xf32>
    "tpu.trace_stop"() : () -> ()
    %c40_13 = arith.constant 40 : index
    %c32_14 = arith.constant 32 : index
    %43 = vector.load %arg2[%c40_13, %c32_14] : memref<48x128xbf16, #tpu.memory_space<vmem>>, vector<1x32xbf16>
    %44 = arith.extf %43 : vector<1x32xbf16> to vector<1x32xf32>
    %45 = vector.extract_strided_slice %42 {offsets = [0, 0, 0], sizes = [1, 16, 8], strides = [1, 1, 1]} : vector<2x16x8xf32> to vector<1x16x8xf32>
    %46 = vector.shape_cast %45 : vector<1x16x8xf32> to vector<16x8xf32>
    %47 = arith.truncf %46 : vector<16x8xf32> to vector<16x8xbf16>
    %c32_15 = arith.constant 32 : index
    %c32_16 = arith.constant 32 : index
    %48 = vector.load %arg2[%c32_15, %c32_16] : memref<48x128xbf16, #tpu.memory_space<vmem>>, vector<8x32xbf16>
    %cst_17 = arith.constant dense<0.000000e+00> : vector<16x32xf32>
    %49 = tpu.matmul %47, %48, %cst_17 {dimension_numbers = #tpu.dot_dimension_numbers<[1], [0], [0], [1], [0, 0, 1, 1], [], []>} : vector<16x8xbf16>, vector<8x32xbf16>, vector<16x32xf32> -> vector<16x32xf32>
    %50 = vector.broadcast %44 : vector<1x32xf32> to vector<16x32xf32>
    %51 = arith.addf %50, %49 : vector<16x32xf32>
    %52 = vector.extract_strided_slice %42 {offsets = [1, 0, 0], sizes = [1, 16, 8], strides = [1, 1, 1]} : vector<2x16x8xf32> to vector<1x16x8xf32>
    %53 = vector.shape_cast %52 : vector<1x16x8xf32> to vector<16x8xf32>
    %54 = arith.truncf %53 : vector<16x8xf32> to vector<16x8xbf16>
    %c32_18 = arith.constant 32 : index
    %c64 = arith.constant 64 : index
    %55 = vector.load %arg2[%c32_18, %c64] : memref<48x128xbf16, #tpu.memory_space<vmem>>, vector<8x32xbf16>
    %cst_19 = arith.constant dense<0.000000e+00> : vector<16x32xf32>
    %56 = tpu.matmul %54, %55, %cst_19 {dimension_numbers = #tpu.dot_dimension_numbers<[1], [0], [0], [1], [0, 0, 1, 1], [], []>} : vector<16x8xbf16>, vector<8x32xbf16>, vector<16x32xf32> -> vector<16x32xf32>
    %57 = arith.addf %51, %56 : vector<16x32xf32>
    %cst_20 = arith.constant 0.000000e+00 : f32
    %58 = vector.broadcast %cst_20 : f32 to vector<16x32xf32>
    %59 = arith.maximumf %57, %58 : vector<16x32xf32>
    %60 = arith.truncf %59 : vector<16x32xf32> to vector<16x32xbf16>
    %c32_21 = arith.constant 32 : index
    %c96 = arith.constant 96 : index
    %61 = vector.load %arg2[%c32_21, %c96] : memref<48x128xbf16, #tpu.memory_space<vmem>>, vector<4x16xbf16>
    %cst_22 = arith.constant dense<0.000000e+00> : vector<4x32xf32>
    %62 = tpu.matmul %61, %60, %cst_22 {dimension_numbers = #tpu.dot_dimension_numbers<[1], [0], [0], [1], [0, 0, 1, 1], [], []>} : vector<4x16xbf16>, vector<16x32xbf16>, vector<4x32xf32> -> vector<4x32xf32>
    %63 = arith.truncf %62 : vector<4x32xf32> to vector<4x32xbf16>
    %c0_23 = arith.constant 0 : index
    %c48 = arith.constant 48 : index
    %64 = vector.load %arg2[%c0_23, %c48] : memref<48x128xbf16, #tpu.memory_space<vmem>>, vector<32x32xbf16>
    %cst_24 = arith.constant dense<0.000000e+00> : vector<4x32xf32>
    %65 = tpu.matmul %63, %64, %cst_24 {dimension_numbers = #tpu.dot_dimension_numbers<[1], [0], [0], [1], [0, 0, 1, 1], [], []>} : vector<4x32xbf16>, vector<32x32xbf16>, vector<4x32xf32> -> vector<4x32xf32>
    %c40_25 = arith.constant 40 : index
    %c64_26 = arith.constant 64 : index
    %66 = vector.load %arg2[%c40_25, %c64_26] : memref<48x128xbf16, #tpu.memory_space<vmem>>, vector<1x32xbf16>
    %67 = arith.extf %66 : vector<1x32xbf16> to vector<1x32xf32>
    %68 = vector.broadcast %67 : vector<1x32xf32> to vector<4x32xf32>
    %69 = arith.addf %65, %68 : vector<4x32xf32>
    %cst_27 = arith.constant 0.000000e+00 : f32
    %70 = vector.broadcast %cst_27 : f32 to vector<4x32xf32>
    %71 = arith.maximumf %69, %70 : vector<4x32xf32>
    %c0_28 = arith.constant 0 : index
    %c112 = arith.constant 112 : index
    %72 = vector.load %arg2[%c0_28, %c112] : memref<48x128xbf16, #tpu.memory_space<vmem>>, vector<16x4xbf16>
    %73 = arith.truncf %71 : vector<4x32xf32> to vector<4x32xbf16>
    %cst_29 = arith.constant dense<0.000000e+00> : vector<16x32xf32>
    %74 = tpu.matmul %72, %73, %cst_29 {dimension_numbers = #tpu.dot_dimension_numbers<[1], [0], [0], [1], [0, 0, 1, 1], [], []>} : vector<16x4xbf16>, vector<4x32xbf16>, vector<16x32xf32> -> vector<16x32xf32>
    %75 = arith.truncf %74 : vector<16x32xf32> to vector<16x32xbf16>
    %c0_30 = arith.constant 0 : index
    %c80 = arith.constant 80 : index
    %76 = vector.load %arg2[%c0_30, %c80] : memref<48x128xbf16, #tpu.memory_space<vmem>>, vector<32x32xbf16>
    %cst_31 = arith.constant dense<0.000000e+00> : vector<16x32xf32>
    %77 = tpu.matmul %75, %76, %cst_31 {dimension_numbers = #tpu.dot_dimension_numbers<[1], [0], [0], [1], [0, 0, 1, 1], [], []>} : vector<16x32xbf16>, vector<32x32xbf16>, vector<16x32xf32> -> vector<16x32xf32>
    %c40_32 = arith.constant 40 : index
    %c96_33 = arith.constant 96 : index
    %78 = vector.load %arg2[%c40_32, %c96_33] : memref<48x128xbf16, #tpu.memory_space<vmem>>, vector<1x32xbf16>
    %79 = arith.extf %78 : vector<1x32xbf16> to vector<1x32xf32>
    %80 = vector.broadcast %79 : vector<1x32xf32> to vector<16x32xf32>
    %81 = arith.addf %77, %80 : vector<16x32xf32>
    %cst_34 = arith.constant 0.000000e+00 : f32
    %82 = vector.broadcast %cst_34 : f32 to vector<16x32xf32>
    %83 = arith.maximumf %81, %82 : vector<16x32xf32>
    %c0_35 = arith.constant 0 : index
    %c0_36 = arith.constant 0 : index
    %c0_37 = arith.constant 0 : index
    %84 = vector.load %arg3[%c0_35, %c0_36, %c0_37] : memref<1x16x64xf32, #tpu.memory_space<vmem>>, vector<1x16x32xf32>
    %85 = vector.shape_cast %84 : vector<1x16x32xf32> to vector<16x32xf32>
    %86 = vector.shape_cast %59 : vector<16x32xf32> to vector<1x16x32xf32>
    tpu.vector_store %arg3[%c0_35, %c0_36, %c0_37], %86 {strides = array<i32>} : memref<1x16x64xf32, #tpu.memory_space<vmem>>, vector<1x16x32xf32>,
    %c0_38 = arith.constant 0 : index
    %c0_39 = arith.constant 0 : index
    %c32_40 = arith.constant 32 : index
    %87 = vector.load %arg3[%c0_38, %c0_39, %c32_40] : memref<1x16x64xf32, #tpu.memory_space<vmem>>, vector<1x16x32xf32>
    %88 = vector.shape_cast %87 : vector<1x16x32xf32> to vector<16x32xf32>
    %89 = vector.shape_cast %83 : vector<16x32xf32> to vector<1x16x32xf32>
    tpu.vector_store %arg3[%c0_38, %c0_39, %c32_40], %89 {strides = array<i32>} : memref<1x16x64xf32, #tpu.memory_space<vmem>>, vector<1x16x32xf32>,
    return
  }
  func.func @transform_0(%arg0: i32) -> (i32, i32, i32) {
    %c0_i32 = arith.constant 0 : i32
    %c0_i32_0 = arith.constant 0 : i32
    %c0_i32_1 = arith.constant 0 : i32
    return %arg0, %c0_i32, %c0_i32_0 : i32, i32, i32
  }
  func.func @transform_1(%arg0: i32) -> (i32, i32) {
    %c0_i32 = arith.constant 0 : i32
    %c0_i32_0 = arith.constant 0 : i32
    %c0_i32_1 = arith.constant 0 : i32
    return %c0_i32, %c0_i32_0 : i32, i32
  }
  func.func @transform_2(%arg0: i32) -> (i32, i32, i32) {
    %c0_i32 = arith.constant 0 : i32
    %c0_i32_0 = arith.constant 0 : i32
    %c0_i32_1 = arith.constant 0 : i32
    return %arg0, %c0_i32, %c0_i32_0 : i32, i32, i32
  }
}

</mosaic_0001>

<llo_original>
// kernel: tpu_custom_call.1
$region0: #{tpu_custom_call.1}
  #allocation0 [shape = 'u32[]', space=smem, size = 0x4, offset = 0x4, fixed_abs, tag = 'smem constant byte address 0x4 - core index']
  #allocation1 [shape = 'u32[144,128]{1,0:T(1,128)}', space=vmem, size = 0x12000, scoped, tag = 'internal scratch']
  %s0 = inlined_call_operand.vmem [shape: bf16[2,16,8], index: 0, kind: input, shape index: {}]
  %s1 = inlined_call_operand.vmem [shape: bf16[48,128], index: 1, kind: input, shape index: {}]
  %s2 = inlined_call_operand.hbm [shape: f32[2,16,64], index: 2, kind: output, shape index: {}]
  %s3 = sld [smem:[#allocation0]]
  $region41: #{tpu_custom_call.1} parent=0
    _
  %s5 = ssub.s32 1, %s3
  %s6 = scalar_select 0, %s5, %s3
  $region1: #{tpu_custom_call.1} parent=0
    #allocation2 [shape = 'u8[16384]{0}', space=vmem, size = 0x4000, scoped, tag = 'output window, operand 0']
    #allocation3 [shape = 's32[2]{0}', space=sflag, size = 0x8, scoped, tag = 'scoped memory for tpu_custom_call.1']
    %7 = vsyncpa [#allocation3], 0
    %s8 = scalar_lea.sflag [#allocation3], 1
    %9 = vsyncpa %s8, 0
    loop: start=0, step=1, limit=4
    $region2: #{tpu_custom_call.1} parent=1 // loop_pre_header
      _
    $region3: #{tpu_custom_call.1} parent=1 // loop_header
      %s11 = sphi 0, %s15
      %p12 = scmp.ge.s32.totalorder %s11, 4
      %s21 = sphi 0, %s23
      %s24 = sphi 0, %s21
      %s25 = sphi 0, %s24
      %s41 = sphi 0, %s25
      %s45 = sphi 0, %s45
      %s47 = sphi 0, %s45
      %s48 = sphi 0, %s47
      %s62 = sphi 0, %s48
      %s68 = sphi 0, %s70
      %s71 = sphi 0, %s68
      %s72 = sphi 0, %s71
      %s88 = sphi 0, %s72
    $region4: #{tpu_custom_call.1} parent=1 // loop_header_branch
      %14 = sbr.rel (%p12) target = $region8
    $region5: #{tpu_custom_call.1} parent=1 // loop_body
      %s16 = ssub.s32 %s11, 1
      %s17 = ssub.s32 %s11, 2
      %s18 = sadd.s32 %s11, 1
      %s19 = ssub.s32 %s11, %s18
      %p20 = scmp.eq.s32.totalorder %s19, 0
      %s22 = sadd.s32 %s21, 1
      %s23 = scalar_select %p20, %s21, %s22
      %p26 = pneg %p20
      %p27 = scmp.eq.s32.totalorder %s11, 1
      %p28 = por %p26, %p27
      %p29 = scmp.ne.s32.totalorder %s21, %s24
      %p30 = scmp.eq.s32.totalorder %s11, 0
      %p31 = por %p29, %p30
      %p32 = scmp.ne.s32.totalorder %s21, %s24
      %p33 = scmp.eq.s32.totalorder %s16, 1
      %p34 = por %p32, %p33
      %p35 = scmp.ne.s32.totalorder %s24, %s25
      %p36 = scmp.eq.s32.totalorder %s16, 0
      %p37 = por %p35, %p36
      %p38 = scmp.ne.s32.totalorder %s24, %s25
      %p39 = scmp.eq.s32.totalorder %s17, 1
      %p40 = por %p38, %p39
      %p42 = scmp.ne.s32.totalorder %s25, %s41
      %p43 = scmp.eq.s32.totalorder %s17, 0
      %p44 = por %p42, %p43
      %s46 = sadd.s32 %s45, 1
      %p49 = scmp.eq.s32.totalorder %s11, 1
      %p50 = scmp.ne.s32.totalorder %s45, %s47
      %p51 = scmp.eq.s32.totalorder %s11, 0
      %p52 = por %p50, %p51
      %p53 = scmp.ne.s32.totalorder %s45, %s47
      %p54 = scmp.eq.s32.totalorder %s16, 1
      %p55 = por %p53, %p54
      %p56 = scmp.ne.s32.totalorder %s47, %s48
      %p57 = scmp.eq.s32.totalorder %s16, 0
      %p58 = por %p56, %p57
      %p59 = scmp.ne.s32.totalorder %s47, %s48
      %p60 = scmp.eq.s32.totalorder %s17, 1
      %p61 = por %p59, %p60
      %p63 = scmp.ne.s32.totalorder %s48, %s62
      %p64 = scmp.eq.s32.totalorder %s17, 0
      %p65 = por %p63, %p64
      %s66 = ssub.s32 %s11, %s18
      %p67 = scmp.eq.s32.totalorder %s66, 0
      %s69 = sadd.s32 %s68, 1
      %s70 = scalar_select %p67, %s68, %s69
      %p73 = pneg %p67
      %p74 = scmp.eq.s32.totalorder %s11, 1
      %p75 = por %p73, %p74
      %p76 = scmp.ne.s32.totalorder %s68, %s71
      %p77 = scmp.eq.s32.totalorder %s11, 0
      %p78 = por %p76, %p77
      %p79 = scmp.ne.s32.totalorder %s68, %s71
      %p80 = scmp.eq.s32.totalorder %s16, 1
      %p81 = por %p79, %p80
      %p82 = scmp.ne.s32.totalorder %s71, %s72
      %p83 = scmp.eq.s32.totalorder %s16, 0
      %p84 = por %p82, %p83
      %p85 = scmp.ne.s32.totalorder %s71, %s72
      %p86 = scmp.eq.s32.totalorder %s17, 1
      %p87 = por %p85, %p86
      %p89 = scmp.ne.s32.totalorder %s72, %s88
      %p90 = scmp.eq.s32.totalorder %s17, 0
      %p91 = por %p89, %p90
      %p92 = scmp.le.s32.totalorder 1, %s11
      %p93 = scmp.lt.s32.totalorder %s11, 3
      %p94 = pnand %p92, %p93
      %p95 = pneg %p94
      // Predicated region
      $region9: #{tpu_custom_call.1} parent=5 // pred_check
        _
      $region10: #{tpu_custom_call.1} parent=5 // pred_check_branch
        %97 = sbr.rel (%p94) target = $region12
      $region11: #{tpu_custom_call.1} parent=5 // pred_region
        %s98 = ssub.s32 %s11, 1
        // Predicated region
        $region13: #{tpu_custom_call.1} parent=11 // pred_check
          %p99 = pneg %p58
        $region14: #{tpu_custom_call.1} parent=11 // pred_check_branch
          %101 = sbr.rel (%p99) target = $region16
        $region15: #{tpu_custom_call.1} parent=11 // pred_region
          _
        $region16: #{tpu_custom_call.1} parent=11 // pred_fallthru
          _
      $region12: #{tpu_custom_call.1} parent=5 // pred_fallthru
        _
      %p102 = scmp.lt.s32.totalorder %s11, 2
      // Predicated region
      $region17: #{tpu_custom_call.1} parent=5 // pred_check
        %p103 = pneg %p102
      $region18: #{tpu_custom_call.1} parent=5 // pred_check_branch
        %105 = sbr.rel (%p103) target = $region20
      $region19: #{tpu_custom_call.1} parent=5 // pred_region
        // Predicated region
        $region21: #{tpu_custom_call.1} parent=19 // pred_check
          %p106 = pneg %p31
        $region22: #{tpu_custom_call.1} parent=19 // pred_check_branch
          %108 = sbr.rel (%p106) target = $region24
        $region23: #{tpu_custom_call.1} parent=19 // pred_region
          %p109 = scmp.lt.s32.totalorder %s11, 1
          %s110 = scalar_select %p109, %s11, 1
          %s111 = smul.addr %s110, 2
          %s112 = smul.addr %s111, 4
          %s113 = scalar_lea.vmem %s0, %s112
        $region24: #{tpu_custom_call.1} parent=19 // pred_fallthru
          _
      $region20: #{tpu_custom_call.1} parent=5 // pred_fallthru
        _
      %p114 = scmp.le.s32.totalorder 1, %s11
      %p115 = scmp.lt.s32.totalorder %s11, 3
      %p116 = pnand %p114, %p115
      %p117 = pneg %p116
      // Predicated region
      $region25: #{tpu_custom_call.1} parent=5 // pred_check
        _
      $region26: #{tpu_custom_call.1} parent=5 // pred_check_branch
        %119 = sbr.rel (%p116) target = $region28
      $region27: #{tpu_custom_call.1} parent=5 // pred_region
        %s120 = ssub.s32 %s11, 1
        %p121 = scmp.lt.s32.totalorder %s16, 1
        %s122 = scalar_select %p121, %s16, 1
        %s123 = smul.addr %s122, 2
        %s124 = smul.addr %s123, 4
        %s125 = scalar_lea.vmem %s0, %s124
        %p126 = pneg %p37
        %p127 = pneg %p34
        %p128 = pneg %p58
        %p129 = pneg %p55
        %p130 = pneg %p84
        %p131 = pneg %p81
        %s132 = sand.u32 %s71, 1
        %s133 = scalar_lea.sflag [#allocation3], %s132
        %s134 = sand.u32 %s71, 1
        %s135 = smul.addr %s134, 16
        %s136 = scalar_lea.vmem [#allocation2], %s135
        %p137 = scmp.lt.s32.totalorder %s16, 1
        %s138 = scalar_select %p137, %s16, 1
        %s139 = smul.addr %s138, 2
        %s140 = smul.addr %s139, 4
        %s141 = scalar_lea.vmem %s0, %s140
        %v143 = vld [vmem:[%s141] sm:$0xf]
        %v144 = vld [vmem:[%s141 + $0x4] sm:$0xf]
        %v145 = vld [vmem:[%s1 + $0x10] sm:$0xf]
        %v146 = vld [vmem:[%s1 + $0x14] sm:$0x1]
        %v147 = vunpack.c.l.bf16 %v146
        %v148 = vlaneseq
        %v149 = vshrl.u32 %v148, 7
        %v150 = vsub.s32 0, %v149
        %v151 = vrot.slane %v147, %v150
        %v154 = vunpack.c.l.b16 %v143
        %v155 = vunpack.c.l.b16 %v144
        %v156 = vpack.c.b16 %v155, %v154
        %vm157 = vcmask 64512
        %v159 = vsel %vm157, %v156, 0
        %vm161 = vcmask 1043456
        %v163 = vsel %vm161, %v145, 0
        %165 = vmatprep.subr.bf16.mxu0 0
        %166 = vmatpush1.bf16.msra.mxu0 %v163
        %167 = vmatprep.subr.bf16.mxu0 0
        %168 = vmatpush1.bf16.msra.mxu0 0
        %169 = vmatprep.subr.bf16.mxu0 0
        %170 = vmatpush1.bf16.msra.mxu0 0
        %171 = vmatprep.subr.bf16.mxu0 0
        %172 = vmatpush1.bf16.msra.mxu0 0
        %173 = vmatprep.subr.bf16.mxu0 0
        %174 = vmatpush1.bf16.msra.mxu0 0
        %175 = vmatprep.subr.bf16.mxu0 0
        %176 = vmatpush1.bf16.msra.mxu0 0
        %177 = vmatprep.subr.bf16.mxu0 0
        %178 = vmatpush1.bf16.msra.mxu0 0
        %179 = vmatprep.subr.bf16.mxu0 0
        %180 = vmatpush1.bf16.msra.mxu0 0
        %181 = vmatprep.subr.bf16.mxu0 0
        %182 = vmatpush1.bf16.msra.mxu0 0
        %183 = vmatprep.subr.bf16.mxu0 0
        %184 = vmatpush1.bf16.msra.mxu0 0
        %185 = vmatprep.subr.bf16.mxu0 0
        %186 = vmatpush1.bf16.msra.mxu0 0
        %187 = vmatprep.subr.bf16.mxu0 0
        %188 = vmatpush1.bf16.msra.mxu0 0
        %189 = vmatprep.subr.bf16.mxu0 0
        %190 = vmatpush1.bf16.msra.mxu0 0
        %191 = vmatprep.subr.bf16.mxu0 0
        %192 = vmatpush1.bf16.msra.mxu0 0
        %193 = vmatprep.subr.bf16.mxu0 0
        %194 = vmatpush1.bf16.msra.mxu0 0
        %195 = vmatprep.subr.bf16.mxu0 0
        %196 = vmatpush1.bf16.msra.mxu0 0
        %197 = vmatprep.mubr.bf16.mxu0 0
        %198 = vmatmul.mubr.bf16.gmra.mrb[0].mxu0 %v159
        %v199 = vpop.f32.mrb[0].mxu0
        %v200 = vadd.f32 %v151, %v199
        %v201 = vpop.f32.mrb[0].mxu0
        %v202 = vpop.f32.mrb[0].mxu0
        %v203 = vadd.f32 %v151, %v202
        %v204 = vpop.f32.mrb[0].mxu0
        %205 = vdwg.mxu0
        %v206 = vmax.f32 %v200, 0.0
        %v207 = vmax.f32 %v203, 0.0
        %v208 = vpack.c.bf16 %v207, %v206
        %v209 = vld [vmem:[%s1] sm:$0xf]
        %v210 = vld [vmem:[%s1 + $0x4] sm:$0xf]
        %v211 = vld [vmem:[%s1 + $0x8] sm:$0xf]
        %v212 = vld [vmem:[%s1 + $0xc] sm:$0xf]
        %v217 = vunpack.c.l.b16 %v209
        %v218 = vunpack.c.l.b16 %v210
        %v219 = vunpack.c.l.b16 %v211
        %v220 = vunpack.c.l.b16 %v212
        %v221 = vpack.c.b16 %v218, %v217
        %v222 = vpack.c.b16 %v220, %v219
        %vm225 = vcmask 261120
        %v227 = vsel %vm225, %v208, 0
        %229 = vmatprep.subr.bf16.mxu0 0
        %230 = vmatpush1.bf16.msra.mxu0 %v221
        %231 = vmatprep.subr.bf16.mxu0 0
        %232 = vmatpush1.bf16.msra.mxu0 %v222
        %233 = vmatprep.subr.bf16.mxu0 0
        %234 = vmatpush1.bf16.msra.mxu0 0
        %235 = vmatprep.subr.bf16.mxu0 0
        %236 = vmatpush1.bf16.msra.mxu0 0
        %237 = vmatprep.subr.bf16.mxu0 0
        %238 = vmatpush1.bf16.msra.mxu0 0
        %239 = vmatprep.subr.bf16.mxu0 0
        %240 = vmatpush1.bf16.msra.mxu0 0
        %241 = vmatprep.subr.bf16.mxu0 0
        %242 = vmatpush1.bf16.msra.mxu0 0
        %243 = vmatprep.subr.bf16.mxu0 0
        %244 = vmatpush1.bf16.msra.mxu0 0
        %245 = vmatprep.subr.bf16.mxu0 0
        %246 = vmatpush1.bf16.msra.mxu0 0
        %247 = vmatprep.subr.bf16.mxu0 0
        %248 = vmatpush1.bf16.msra.mxu0 0
        %249 = vmatprep.subr.bf16.mxu0 0
        %250 = vmatpush1.bf16.msra.mxu0 0
        %251 = vmatprep.subr.bf16.mxu0 0
        %252 = vmatpush1.bf16.msra.mxu0 0
        %253 = vmatprep.subr.bf16.mxu0 0
        %254 = vmatpush1.bf16.msra.mxu0 0
        %255 = vmatprep.subr.bf16.mxu0 0
        %256 = vmatpush1.bf16.msra.mxu0 0
        %257 = vmatprep.subr.bf16.mxu0 0
        %258 = vmatpush1.bf16.msra.mxu0 0
        %259 = vmatprep.subr.bf16.mxu0 0
        %260 = vmatpush1.bf16.msra.mxu0 0
        %261 = vmatprep.mubr.bf16.mxu0 0
        %262 = vmatmul.mubr.bf16.gmra.mrb[0].mxu0 %v227
        %v263 = vpop.f32.mrb[0].mxu0
        %v264 = vadd.f32 0.0, %v263
        %v265 = vpop.f32.mrb[0].mxu0
        %v266 = vpop.f32.mrb[0].mxu0
        %v267 = vadd.f32 0.0, %v266
        %v268 = vpop.f32.mrb[0].mxu0
        %269 = vdwg.mxu0
        %v270 = vpack.c.bf16 %v267, %v264
        %272 = vrot.lane.b32.xlu0 %v270, 104
        %v273 = vpop.permute.xlu0 %272
        %274 = vrot.lane.b32.xlu0 %v270, 120
        %v275 = vpop.permute.xlu0 %274
        %v277 = vsel %vm157, %v270, 0
        %v280 = vsel %vm157, %v275, 0
        %282 = vmatprep.subr.bf16.mxu0 0
        %283 = vmatpush1.bf16.xpose.msra.mxu0 %v280
        %284 = vmatprep.subr.bf16.mxu0 0
        %285 = vmatpush1.bf16.xpose.msra.mxu0 0
        %286 = vmatprep.subr.bf16.mxu0 0
        %287 = vmatpush1.bf16.xpose.msra.mxu0 0
        %288 = vmatprep.subr.bf16.mxu0 0
        %289 = vmatpush1.bf16.xpose.msra.mxu0 0
        %290 = vmatprep.subr.bf16.mxu0 0
        %291 = vmatpush1.bf16.xpose.msra.mxu0 0
        %292 = vmatprep.subr.bf16.mxu0 0
        %293 = vmatpush1.bf16.xpose.msra.mxu0 0
        %294 = vmatprep.subr.bf16.mxu0 0
        %295 = vmatpush1.bf16.xpose.msra.mxu0 0
        %296 = vmatprep.subr.bf16.mxu0 0
        %297 = vmatpush1.bf16.xpose.msra.mxu0 0
        %298 = vmatprep.subr.bf16.mxu0 0
        %299 = vmatpush1.bf16.xpose.msra.mxu0 0
        %300 = vmatprep.subr.bf16.mxu0 0
        %301 = vmatpush1.bf16.xpose.msra.mxu0 0
        %302 = vmatprep.subr.bf16.mxu0 0
        %303 = vmatpush1.bf16.xpose.msra.mxu0 0
        %304 = vmatprep.subr.bf16.mxu0 0
        %305 = vmatpush1.bf16.xpose.msra.mxu0 0
        %306 = vmatprep.subr.bf16.mxu0 0
        %307 = vmatpush1.bf16.xpose.msra.mxu0 0
        %308 = vmatprep.subr.bf16.mxu0 0
        %309 = vmatpush1.bf16.xpose.msra.mxu0 0
        %310 = vmatprep.subr.bf16.mxu0 0
        %311 = vmatpush1.bf16.xpose.msra.mxu0 0
        %312 = vmatprep.subr.bf16.mxu0 0
        %313 = vmatpush1.bf16.xpose.msra.mxu0 0
        %314 = vmatprep.mubr.bf16.mxu0 0
        %315 = vmatmul.mubr.bf16.gmra.mrb[0].mxu0 %v277
        %v316 = vpop.f32.mrb[0].mxu0
        %v317 = vadd.f32 0.0, %v316
        %v318 = vpop.f32.mrb[0].mxu0
        %v319 = vpop.f32.mrb[0].mxu0
        %v320 = vadd.f32 0.0, %v319
        %v321 = vpop.f32.mrb[0].mxu0
        %322 = vdwg.mxu0
        %323 = vrot.lane.b32.xlu0 %v273, 120
        %v324 = vpop.permute.xlu0 %323
        %v326 = vsel %vm157, %v273, 0
        %v329 = vsel %vm157, %v324, 0
        %331 = vmatprep.subr.bf16.mxu0 0
        %332 = vmatpush1.bf16.xpose.msra.mxu0 %v329
        %333 = vmatprep.subr.bf16.mxu0 0
        %334 = vmatpush1.bf16.xpose.msra.mxu0 0
        %335 = vmatprep.subr.bf16.mxu0 0
        %336 = vmatpush1.bf16.xpose.msra.mxu0 0
        %337 = vmatprep.subr.bf16.mxu0 0
        %338 = vmatpush1.bf16.xpose.msra.mxu0 0
        %339 = vmatprep.subr.bf16.mxu0 0
        %340 = vmatpush1.bf16.xpose.msra.mxu0 0
        %341 = vmatprep.subr.bf16.mxu0 0
        %342 = vmatpush1.bf16.xpose.msra.mxu0 0
        %343 = vmatprep.subr.bf16.mxu0 0
        %344 = vmatpush1.bf16.xpose.msra.mxu0 0
        %345 = vmatprep.subr.bf16.mxu0 0
        %346 = vmatpush1.bf16.xpose.msra.mxu0 0
        %347 = vmatprep.subr.bf16.mxu0 0
        %348 = vmatpush1.bf16.xpose.msra.mxu0 0
        %349 = vmatprep.subr.bf16.mxu0 0
        %350 = vmatpush1.bf16.xpose.msra.mxu0 0
        %351 = vmatprep.subr.bf16.mxu0 0
        %352 = vmatpush1.bf16.xpose.msra.mxu0 0
        %353 = vmatprep.subr.bf16.mxu0 0
        %354 = vmatpush1.bf16.xpose.msra.mxu0 0
        %355 = vmatprep.subr.bf16.mxu0 0
        %356 = vmatpush1.bf16.xpose.msra.mxu0 0
        %357 = vmatprep.subr.bf16.mxu0 0
        %358 = vmatpush1.bf16.xpose.msra.mxu0 0
        %359 = vmatprep.subr.bf16.mxu0 0
        %360 = vmatpush1.bf16.xpose.msra.mxu0 0
        %361 = vmatprep.subr.bf16.mxu0 0
        %362 = vmatpush1.bf16.xpose.msra.mxu0 0
        %363 = vmatprep.mubr.bf16.mxu0 0
        %364 = vmatmul.mubr.bf16.gmra.mrb[0].mxu0 %v326
        %v365 = vpop.f32.mrb[0].mxu0
        %v366 = vadd.f32 0.0, %v365
        %v367 = vpop.f32.mrb[0].mxu0
        %v368 = vpop.f32.mrb[0].mxu0
        %v369 = vadd.f32 0.0, %v368
        %v370 = vpop.f32.mrb[0].mxu0
        %371 = vdwg.mxu0
        %v372 = vmul.f32 %v317, 0.35355338
        %v373 = vmul.f32 %v320, 0.35355338
        %v374 = vmul.f32 %v366, 0.35355338
        %v375 = vmul.f32 %v369, 0.35355338
        %vm376 = vcmask 130048
        %v377 = vsel %vm376, %v372, -inf
        %378 = vmax.xlane.f32.xlu0 %v377
        %v379 = vpop.xlane.xlu0 %378
        %v380 = vsel %vm376, %v373, -inf
        %381 = vmax.xlane.f32.xlu0 %v380
        %v382 = vpop.xlane.xlu0 %381
        %v383 = vsel %vm376, %v374, -inf
        %384 = vmax.xlane.f32.xlu0 %v383
        %v385 = vpop.xlane.xlu0 %384
        %v386 = vsel %vm376, %v375, -inf
        %387 = vmax.xlane.f32.xlu0 %v386
        %v388 = vpop.xlane.xlu0 %387
        %v389 = vsub.f32 %v372, %v379
        %v390 = vsub.f32 %v373, %v382
        %v391 = vsub.f32 %v374, %v385
        %v392 = vsub.f32 %v375, %v388
        %v393 = vmul.f32 %v389, 1.442695
        %v394 = vpow.pop %v393
        %v395 = vmul.f32 %v390, 1.442695
        %v396 = vpow.pop %v395
        %v397 = vmul.f32 %v391, 1.442695
        %v398 = vpow.pop %v397
        %v399 = vmul.f32 %v392, 1.442695
        %v400 = vpow.pop %v399
        %v401 = vsel %vm376, %v394, 0.0
        %402 = vadd.xlane.f32.xlu0 %v401
        %v403 = vpop.xlane.xlu0 %402
        %v404 = vsel %vm376, %v396, 0.0
        %405 = vadd.xlane.f32.xlu0 %v404
        %v406 = vpop.xlane.xlu0 %405
        %v407 = vsel %vm376, %v398, 0.0
        %408 = vadd.xlane.f32.xlu0 %v407
        %v409 = vpop.xlane.xlu0 %408
        %v410 = vsel %vm376, %v400, 0.0
        %411 = vadd.xlane.f32.xlu0 %v410
        %v412 = vpop.xlane.xlu0 %411
        %v413 = vrcp.pop %v403
        %v414 = vmul.f32 %v394, %v413
        %v415 = vrcp.pop %v406
        %v416 = vmul.f32 %v396, %v415
        %v417 = vrcp.pop %v409
        %v418 = vmul.f32 %v398, %v417
        %v419 = vrcp.pop %v412
        %v420 = vmul.f32 %v400, %v419
        %v421 = vpack.c.bf16 %v416, %v414
        %v422 = vpack.c.bf16 %v420, %v418
        %423 = vrot.lane.b32.xlu0 %v270, 112
        %v424 = vpop.permute.xlu0 %423
        %v427 = vsel %vm376, %v421, 0
        %429 = vmatprep.subr.bf16.mxu0 0
        %430 = vmatpush1.bf16.msra.mxu0 %v424
        %431 = vmatprep.subr.bf16.mxu0 0
        %432 = vmatpush1.bf16.msra.mxu0 0
        %433 = vmatprep.subr.bf16.mxu0 0
        %434 = vmatpush1.bf16.msra.mxu0 0
        %435 = vmatprep.subr.bf16.mxu0 0
        %436 = vmatpush1.bf16.msra.mxu0 0
        %437 = vmatprep.subr.bf16.mxu0 0
        %438 = vmatpush1.bf16.msra.mxu0 0
        %439 = vmatprep.subr.bf16.mxu0 0
        %440 = vmatpush1.bf16.msra.mxu0 0
        %441 = vmatprep.subr.bf16.mxu0 0
        %442 = vmatpush1.bf16.msra.mxu0 0
        %443 = vmatprep.subr.bf16.mxu0 0
        %444 = vmatpush1.bf16.msra.mxu0 0
        %445 = vmatprep.subr.bf16.mxu0 0
        %446 = vmatpush1.bf16.msra.mxu0 0
        %447 = vmatprep.subr.bf16.mxu0 0
        %448 = vmatpush1.bf16.msra.mxu0 0
        %449 = vmatprep.subr.bf16.mxu0 0
        %450 = vmatpush1.bf16.msra.mxu0 0
        %451 = vmatprep.subr.bf16.mxu0 0
        %452 = vmatpush1.bf16.msra.mxu0 0
        %453 = vmatprep.subr.bf16.mxu0 0
        %454 = vmatpush1.bf16.msra.mxu0 0
        %455 = vmatprep.subr.bf16.mxu0 0
        %456 = vmatpush1.bf16.msra.mxu0 0
        %457 = vmatprep.subr.bf16.mxu0 0
        %458 = vmatpush1.bf16.msra.mxu0 0
        %459 = vmatprep.subr.bf16.mxu0 0
        %460 = vmatpush1.bf16.msra.mxu0 0
        %461 = vmatprep.mubr.bf16.mxu0 0
        %462 = vmatmul.mubr.bf16.gmra.mrb[0].mxu0 %v427
        %v463 = vpop.f32.mrb[0].mxu0
        %v464 = vadd.f32 0.0, %v463
        %v465 = vpop.f32.mrb[0].mxu0
        %v466 = vpop.f32.mrb[0].mxu0
        %v467 = vadd.f32 0.0, %v466
        %v468 = vpop.f32.mrb[0].mxu0
        %469 = vdwg.mxu0
        %470 = vrot.lane.b32.xlu0 %v273, 112
        %v471 = vpop.permute.xlu0 %470
        %v474 = vsel %vm376, %v422, 0
        %476 = vmatprep.subr.bf16.mxu0 0
        %477 = vmatpush1.bf16.msra.mxu0 %v471
        %478 = vmatprep.subr.bf16.mxu0 0
        %479 = vmatpush1.bf16.msra.mxu0 0
        %480 = vmatprep.subr.bf16.mxu0 0
        %481 = vmatpush1.bf16.msra.mxu0 0
        %482 = vmatprep.subr.bf16.mxu0 0
        %483 = vmatpush1.bf16.msra.mxu0 0
        %484 = vmatprep.subr.bf16.mxu0 0
        %485 = vmatpush1.bf16.msra.mxu0 0
        %486 = vmatprep.subr.bf16.mxu0 0
        %487 = vmatpush1.bf16.msra.mxu0 0
        %488 = vmatprep.subr.bf16.mxu0 0
        %489 = vmatpush1.bf16.msra.mxu0 0
        %490 = vmatprep.subr.bf16.mxu0 0
        %491 = vmatpush1.bf16.msra.mxu0 0
        %492 = vmatprep.subr.bf16.mxu0 0
        %493 = vmatpush1.bf16.msra.mxu0 0
        %494 = vmatprep.subr.bf16.mxu0 0
        %495 = vmatpush1.bf16.msra.mxu0 0
        %496 = vmatprep.subr.bf16.mxu0 0
        %497 = vmatpush1.bf16.msra.mxu0 0
        %498 = vmatprep.subr.bf16.mxu0 0
        %499 = vmatpush1.bf16.msra.mxu0 0
        %500 = vmatprep.subr.bf16.mxu0 0
        %501 = vmatpush1.bf16.msra.mxu0 0
        %502 = vmatprep.subr.bf16.mxu0 0
        %503 = vmatpush1.bf16.msra.mxu0 0
        %504 = vmatprep.subr.bf16.mxu0 0
        %505 = vmatpush1.bf16.msra.mxu0 0
        %506 = vmatprep.subr.bf16.mxu0 0
        %507 = vmatpush1.bf16.msra.mxu0 0
        %508 = vmatprep.mubr.bf16.mxu0 0
        %509 = vmatmul.mubr.bf16.gmra.mrb[0].mxu0 %v474
        %v510 = vpop.f32.mrb[0].mxu0
        %v511 = vadd.f32 0.0, %v510
        %v512 = vpop.f32.mrb[0].mxu0
        %v513 = vpop.f32.mrb[0].mxu0
        %v514 = vadd.f32 0.0, %v513
        %v515 = vpop.f32.mrb[0].mxu0
        %516 = vdwg.mxu0
        %v517 = vld [vmem:[%s1 + $0x14] sm:$0x1]
        %v518 = vunpack.c.l.bf16 %v517
        %v519 = vpack.c.bf16 %v467, %v464
        %v520 = vld [vmem:[%s1 + $0x10] sm:$0xf]
        %v522 = vunpack.c.l.b16 %v520
        %v523 = vpack.c.b16 %v522, %v522
        %524 = vrot.lane.b32.xlu0 %v523, 96
        %v525 = vpop.permute.xlu0 %524
        %v527 = vsel %vm157, %v519, 0
        %v530 = vsel %vm161, %v525, 0
        %532 = vmatprep.subr.bf16.mxu0 0
        %533 = vmatpush1.bf16.msra.mxu0 %v530
        %534 = vmatprep.subr.bf16.mxu0 0
        %535 = vmatpush1.bf16.msra.mxu0 0
        %536 = vmatprep.subr.bf16.mxu0 0
        %537 = vmatpush1.bf16.msra.mxu0 0
        %538 = vmatprep.subr.bf16.mxu0 0
        %539 = vmatpush1.bf16.msra.mxu0 0
        %540 = vmatprep.subr.bf16.mxu0 0
        %541 = vmatpush1.bf16.msra.mxu0 0
        %542 = vmatprep.subr.bf16.mxu0 0
        %543 = vmatpush1.bf16.msra.mxu0 0
        %544 = vmatprep.subr.bf16.mxu0 0
        %545 = vmatpush1.bf16.msra.mxu0 0
        %546 = vmatprep.subr.bf16.mxu0 0
        %547 = vmatpush1.bf16.msra.mxu0 0
        %548 = vmatprep.subr.bf16.mxu0 0
        %549 = vmatpush1.bf16.msra.mxu0 0
        %550 = vmatprep.subr.bf16.mxu0 0
        %551 = vmatpush1.bf16.msra.mxu0 0
        %552 = vmatprep.subr.bf16.mxu0 0
        %553 = vmatpush1.bf16.msra.mxu0 0
        %554 = vmatprep.subr.bf16.mxu0 0
        %555 = vmatpush1.bf16.msra.mxu0 0
        %556 = vmatprep.subr.bf16.mxu0 0
        %557 = vmatpush1.bf16.msra.mxu0 0
        %558 = vmatprep.subr.bf16.mxu0 0
        %559 = vmatpush1.bf16.msra.mxu0 0
        %560 = vmatprep.subr.bf16.mxu0 0
        %561 = vmatpush1.bf16.msra.mxu0 0
        %562 = vmatprep.subr.bf16.mxu0 0
        %563 = vmatpush1.bf16.msra.mxu0 0
        %564 = vmatprep.mubr.bf16.mxu0 0
        %565 = vmatmul.mubr.bf16.gmra.mrb[0].mxu0 %v527
        %v566 = vpop.f32.mrb[0].mxu0
        %v567 = vadd.f32 0.0, %v566
        %v568 = vpop.f32.mrb[0].mxu0
        %v569 = vpop.f32.mrb[0].mxu0
        %v570 = vadd.f32 0.0, %v569
        %v571 = vpop.f32.mrb[0].mxu0
        %572 = vdwg.mxu0
        %v573 = vlaneseq
        %v574 = vshrl.u32 %v573, 7
        %v575 = vsub.s32 0, %v574
        %v576 = vrot.slane %v518, %v575
        %579 = vrot.lane.b32.xlu0 %v567, 32
        %v580 = vpop.permute.xlu0 %579
        %581 = vrot.lane.b32.xlu0 %v570, 32
        %v582 = vpop.permute.xlu0 %581
        %v585 = vadd.f32 %v576, %v580
        %v586 = vadd.f32 %v576, %v582
        %v587 = vpack.c.bf16 %v514, %v511
        %588 = vrot.lane.b32.xlu0 %v523, 64
        %v589 = vpop.permute.xlu0 %588
        %v591 = vsel %vm157, %v587, 0
        %v594 = vsel %vm161, %v589, 0
        %596 = vmatprep.subr.bf16.mxu0 0
        %597 = vmatpush1.bf16.msra.mxu0 %v594
        %598 = vmatprep.subr.bf16.mxu0 0
        %599 = vmatpush1.bf16.msra.mxu0 0
        %600 = vmatprep.subr.bf16.mxu0 0
        %601 = vmatpush1.bf16.msra.mxu0 0
        %602 = vmatprep.subr.bf16.mxu0 0
        %603 = vmatpush1.bf16.msra.mxu0 0
        %604 = vmatprep.subr.bf16.mxu0 0
        %605 = vmatpush1.bf16.msra.mxu0 0
        %606 = vmatprep.subr.bf16.mxu0 0
        %607 = vmatpush1.bf16.msra.mxu0 0
        %608 = vmatprep.subr.bf16.mxu0 0
        %609 = vmatpush1.bf16.msra.mxu0 0
        %610 = vmatprep.subr.bf16.mxu0 0
        %611 = vmatpush1.bf16.msra.mxu0 0
        %612 = vmatprep.subr.bf16.mxu0 0
        %613 = vmatpush1.bf16.msra.mxu0 0
        %614 = vmatprep.subr.bf16.mxu0 0
        %615 = vmatpush1.bf16.msra.mxu0 0
        %616 = vmatprep.subr.bf16.mxu0 0
        %617 = vmatpush1.bf16.msra.mxu0 0
        %618 = vmatprep.subr.bf16.mxu0 0
        %619 = vmatpush1.bf16.msra.mxu0 0
        %620 = vmatprep.subr.bf16.mxu0 0
        %621 = vmatpush1.bf16.msra.mxu0 0
        %622 = vmatprep.subr.bf16.mxu0 0
        %623 = vmatpush1.bf16.msra.mxu0 0
        %624 = vmatprep.subr.bf16.mxu0 0
        %625 = vmatpush1.bf16.msra.mxu0 0
        %626 = vmatprep.subr.bf16.mxu0 0
        %627 = vmatpush1.bf16.msra.mxu0 0
        %628 = vmatprep.mubr.bf16.mxu0 0
        %629 = vmatmul.mubr.bf16.gmra.mrb[0].mxu0 %v591
        %v630 = vpop.f32.mrb[0].mxu0
        %v631 = vadd.f32 0.0, %v630
        %v632 = vpop.f32.mrb[0].mxu0
        %v633 = vpop.f32.mrb[0].mxu0
        %v634 = vadd.f32 0.0, %v633
        %v635 = vpop.f32.mrb[0].mxu0
        %636 = vdwg.mxu0
        %639 = vrot.lane.b32.xlu0 %v631, 32
        %v640 = vpop.permute.xlu0 %639
        %641 = vrot.lane.b32.xlu0 %v634, 32
        %v642 = vpop.permute.xlu0 %641
        %v645 = vadd.f32 %v585, %v640
        %v646 = vadd.f32 %v586, %v642
        %v647 = vmax.f32 %v645, 0.0
        %v648 = vmax.f32 %v646, 0.0
        %v649 = vpack.c.bf16 %v648, %v647
        %v650 = vld [vmem:[%s1 + $0x10] sm:$0x3]
        %v652 = vunpack.c.l.b16 %v650
        %v653 = vpack.c.b16 %v652, %v652
        %654 = vrot.lane.b32.xlu0 %v653, 32
        %v655 = vpop.permute.xlu0 %654
        %657 = vrot.lane.b32.xlu0 %v649, 96
        %v658 = vpop.permute.xlu0 %657
        %v661 = vsel %vm376, %v655, 0
        %663 = vmatprep.subr.bf16.mxu0 0
        %664 = vmatpush1.bf16.msra.mxu0 %v658
        %665 = vmatprep.subr.bf16.mxu0 0
        %666 = vmatpush1.bf16.msra.mxu0 0
        %667 = vmatprep.subr.bf16.mxu0 0
        %668 = vmatpush1.bf16.msra.mxu0 0
        %669 = vmatprep.subr.bf16.mxu0 0
        %670 = vmatpush1.bf16.msra.mxu0 0
        %671 = vmatprep.subr.bf16.mxu0 0
        %672 = vmatpush1.bf16.msra.mxu0 0
        %673 = vmatprep.subr.bf16.mxu0 0
        %674 = vmatpush1.bf16.msra.mxu0 0
        %675 = vmatprep.subr.bf16.mxu0 0
        %676 = vmatpush1.bf16.msra.mxu0 0
        %677 = vmatprep.subr.bf16.mxu0 0
        %678 = vmatpush1.bf16.msra.mxu0 0
        %679 = vmatprep.subr.bf16.mxu0 0
        %680 = vmatpush1.bf16.msra.mxu0 0
        %681 = vmatprep.subr.bf16.mxu0 0
        %682 = vmatpush1.bf16.msra.mxu0 0
        %683 = vmatprep.subr.bf16.mxu0 0
        %684 = vmatpush1.bf16.msra.mxu0 0
        %685 = vmatprep.subr.bf16.mxu0 0
        %686 = vmatpush1.bf16.msra.mxu0 0
        %687 = vmatprep.subr.bf16.mxu0 0
        %688 = vmatpush1.bf16.msra.mxu0 0
        %689 = vmatprep.subr.bf16.mxu0 0
        %690 = vmatpush1.bf16.msra.mxu0 0
        %691 = vmatprep.subr.bf16.mxu0 0
        %692 = vmatpush1.bf16.msra.mxu0 0
        %693 = vmatprep.subr.bf16.mxu0 0
        %694 = vmatpush1.bf16.msra.mxu0 0
        %695 = vmatprep.mubr.bf16.mxu0 0
        %696 = vmatmul.mubr.bf16.gmra.mrb[0].mxu0 %v661
        %v697 = vpop.f32.mrb[0].mxu0
        %v698 = vadd.f32 0.0, %v697
        %v699 = vpop.f32.mrb[0].mxu0
        %v700 = vpop.f32.mrb[0].mxu0
        %v701 = vpop.f32.mrb[0].mxu0
        %702 = vdwg.mxu0
        %v703 = vpack.c.bf16 %v698, %v698
        %v704 = vld [vmem:[%s1] sm:$0xf]
        %v705 = vld [vmem:[%s1 + $0x4] sm:$0xf]
        %v706 = vld [vmem:[%s1 + $0x8] sm:$0xf]
        %v707 = vld [vmem:[%s1 + $0xc] sm:$0xf]
        %v712 = vunpack.c.l.b16 %v704
        %v713 = vunpack.c.l.b16 %v705
        %v714 = vunpack.c.l.b16 %v706
        %v715 = vunpack.c.l.b16 %v707
        %v716 = vpack.c.b16 %v713, %v712
        %v717 = vpack.c.b16 %v715, %v714
        %718 = vrot.lane.b32.xlu0 %v716, 80
        %v719 = vpop.permute.xlu0 %718
        %720 = vrot.lane.b32.xlu0 %v717, 80
        %v721 = vpop.permute.xlu0 %720
        %725 = vrot.lane.b32.xlu0 %v576, 64
        %v726 = vpop.permute.xlu0 %725
        %v729 = vsel %vm225, %v703, 0
        %731 = vmatprep.subr.bf16.mxu0 0
        %732 = vmatpush1.bf16.msra.mxu0 %v719
        %733 = vmatprep.subr.bf16.mxu0 0
        %734 = vmatpush1.bf16.msra.mxu0 %v721
        %735 = vmatprep.subr.bf16.mxu0 0
        %736 = vmatpush1.bf16.msra.mxu0 0
        %737 = vmatprep.subr.bf16.mxu0 0
        %738 = vmatpush1.bf16.msra.mxu0 0
        %739 = vmatprep.subr.bf16.mxu0 0
        %740 = vmatpush1.bf16.msra.mxu0 0
        %741 = vmatprep.subr.bf16.mxu0 0
        %742 = vmatpush1.bf16.msra.mxu0 0
        %743 = vmatprep.subr.bf16.mxu0 0
        %744 = vmatpush1.bf16.msra.mxu0 0
        %745 = vmatprep.subr.bf16.mxu0 0
        %746 = vmatpush1.bf16.msra.mxu0 0
        %747 = vmatprep.subr.bf16.mxu0 0
        %748 = vmatpush1.bf16.msra.mxu0 0
        %749 = vmatprep.subr.bf16.mxu0 0
        %750 = vmatpush1.bf16.msra.mxu0 0
        %751 = vmatprep.subr.bf16.mxu0 0
        %752 = vmatpush1.bf16.msra.mxu0 0
        %753 = vmatprep.subr.bf16.mxu0 0
        %754 = vmatpush1.bf16.msra.mxu0 0
        %755 = vmatprep.subr.bf16.mxu0 0
        %756 = vmatpush1.bf16.msra.mxu0 0
        %757 = vmatprep.subr.bf16.mxu0 0
        %758 = vmatpush1.bf16.msra.mxu0 0
        %759 = vmatprep.subr.bf16.mxu0 0
        %760 = vmatpush1.bf16.msra.mxu0 0
        %761 = vmatprep.subr.bf16.mxu0 0
        %762 = vmatpush1.bf16.msra.mxu0 0
        %763 = vmatprep.mubr.bf16.mxu0 0
        %764 = vmatmul.mubr.bf16.gmra.mrb[0].mxu0 %v729
        %v765 = vpop.f32.mrb[0].mxu0
        %v766 = vadd.f32 %v726, %v765
        %v767 = vpop.f32.mrb[0].mxu0
        %v768 = vpop.f32.mrb[0].mxu0
        %v769 = vpop.f32.mrb[0].mxu0
        %770 = vdwg.mxu0
        %v771 = vmax.f32 %v766, 0.0
        %v772 = vld [vmem:[%s1] sm:$0xf]
        %v773 = vld [vmem:[%s1 + $0x4] sm:$0xf]
        %v774 = vpack.c.bf16 %v771, %v771
        %v777 = vunpack.c.l.b16 %v772
        %v778 = vunpack.c.l.b16 %v773
        %v779 = vpack.c.b16 %v778, %v777
        %780 = vrot.lane.b32.xlu0 %v779, 16
        %v781 = vpop.permute.xlu0 %780
        %vm782 = vcmask 31744
        %v784 = vsel %vm782, %v781, 0
        %vm786 = vcmask 1041408
        %v788 = vsel %vm786, %v774, 0
        %790 = vmatprep.subr.bf16.mxu0 0
        %791 = vmatpush1.bf16.msra.mxu0 %v788
        %792 = vmatprep.subr.bf16.mxu0 0
        %793 = vmatpush1.bf16.msra.mxu0 0
        %794 = vmatprep.subr.bf16.mxu0 0
        %795 = vmatpush1.bf16.msra.mxu0 0
        %796 = vmatprep.subr.bf16.mxu0 0
        %797 = vmatpush1.bf16.msra.mxu0 0
        %798 = vmatprep.subr.bf16.mxu0 0
        %799 = vmatpush1.bf16.msra.mxu0 0
        %800 = vmatprep.subr.bf16.mxu0 0
        %801 = vmatpush1.bf16.msra.mxu0 0
        %802 = vmatprep.subr.bf16.mxu0 0
        %803 = vmatpush1.bf16.msra.mxu0 0
        %804 = vmatprep.subr.bf16.mxu0 0
        %805 = vmatpush1.bf16.msra.mxu0 0
        %806 = vmatprep.subr.bf16.mxu0 0
        %807 = vmatpush1.bf16.msra.mxu0 0
        %808 = vmatprep.subr.bf16.mxu0 0
        %809 = vmatpush1.bf16.msra.mxu0 0
        %810 = vmatprep.subr.bf16.mxu0 0
        %811 = vmatpush1.bf16.msra.mxu0 0
        %812 = vmatprep.subr.bf16.mxu0 0
        %813 = vmatpush1.bf16.msra.mxu0 0
        %814 = vmatprep.subr.bf16.mxu0 0
        %815 = vmatpush1.bf16.msra.mxu0 0
        %816 = vmatprep.subr.bf16.mxu0 0
        %817 = vmatpush1.bf16.msra.mxu0 0
        %818 = vmatprep.subr.bf16.mxu0 0
        %819 = vmatpush1.bf16.msra.mxu0 0
        %820 = vmatprep.subr.bf16.mxu0 0
        %821 = vmatpush1.bf16.msra.mxu0 0
        %822 = vmatprep.mubr.bf16.mxu0 0
        %823 = vmatmul.mubr.bf16.gmra.mrb[0].mxu0 %v784
        %v824 = vpop.f32.mrb[0].mxu0
        %v825 = vadd.f32 0.0, %v824
        %v826 = vpop.f32.mrb[0].mxu0
        %v827 = vpop.f32.mrb[0].mxu0
        %v828 = vadd.f32 0.0, %v827
        %v829 = vpop.f32.mrb[0].mxu0
        %830 = vdwg.mxu0
        %v831 = vpack.c.bf16 %v828, %v825
        %832 = vrot.lane.b32.xlu0 %v716, 48
        %v833 = vpop.permute.xlu0 %832
        %834 = vrot.lane.b32.xlu0 %v717, 48
        %v835 = vpop.permute.xlu0 %834
        %838 = vrot.lane.b32.xlu0 %v576, 32
        %v839 = vpop.permute.xlu0 %838
        %v842 = vsel %vm225, %v831, 0
        %844 = vmatprep.subr.bf16.mxu0 0
        %845 = vmatpush1.bf16.msra.mxu0 %v833
        %846 = vmatprep.subr.bf16.mxu0 0
        %847 = vmatpush1.bf16.msra.mxu0 %v835
        %848 = vmatprep.subr.bf16.mxu0 0
        %849 = vmatpush1.bf16.msra.mxu0 0
        %850 = vmatprep.subr.bf16.mxu0 0
        %851 = vmatpush1.bf16.msra.mxu0 0
        %852 = vmatprep.subr.bf16.mxu0 0
        %853 = vmatpush1.bf16.msra.mxu0 0
        %854 = vmatprep.subr.bf16.mxu0 0
        %855 = vmatpush1.bf16.msra.mxu0 0
        %856 = vmatprep.subr.bf16.mxu0 0
        %857 = vmatpush1.bf16.msra.mxu0 0
        %858 = vmatprep.subr.bf16.mxu0 0
        %859 = vmatpush1.bf16.msra.mxu0 0
        %860 = vmatprep.subr.bf16.mxu0 0
        %861 = vmatpush1.bf16.msra.mxu0 0
        %862 = vmatprep.subr.bf16.mxu0 0
        %863 = vmatpush1.bf16.msra.mxu0 0
        %864 = vmatprep.subr.bf16.mxu0 0
        %865 = vmatpush1.bf16.msra.mxu0 0
        %866 = vmatprep.subr.bf16.mxu0 0
        %867 = vmatpush1.bf16.msra.mxu0 0
        %868 = vmatprep.subr.bf16.mxu0 0
        %869 = vmatpush1.bf16.msra.mxu0 0
        %870 = vmatprep.subr.bf16.mxu0 0
        %871 = vmatpush1.bf16.msra.mxu0 0
        %872 = vmatprep.subr.bf16.mxu0 0
        %873 = vmatpush1.bf16.msra.mxu0 0
        %874 = vmatprep.subr.bf16.mxu0 0
        %875 = vmatpush1.bf16.msra.mxu0 0
        %876 = vmatprep.mubr.bf16.mxu0 0
        %877 = vmatmul.mubr.bf16.gmra.mrb[0].mxu0 %v842
        %v878 = vpop.f32.mrb[0].mxu0
        %v879 = vadd.f32 %v839, %v878
        %v880 = vpop.f32.mrb[0].mxu0
        %v881 = vpop.f32.mrb[0].mxu0
        %v882 = vadd.f32 %v839, %v881
        %v883 = vpop.f32.mrb[0].mxu0
        %884 = vdwg.mxu0
        %v885 = vmax.f32 %v879, 0.0
        %v886 = vmax.f32 %v882, 0.0
        %889 = vrot.lane.b32.xlu0 %v647, 96
        %v890 = vpop.permute.xlu0 %889
        %891 = vrot.lane.b32.xlu0 %v648, 96
        %v892 = vpop.permute.xlu0 %891
        %895 = vst.msk [vmem:[%s136] sm:$0xff] %vm225, %v890
        %896 = vst.msk [vmem:[%s136 + $0x8] sm:$0xff] %vm225, %v892
        %899 = vrot.lane.b32.xlu0 %v885, 32
        %v900 = vpop.permute.xlu0 %899
        %901 = vrot.lane.b32.xlu0 %v886, 32
        %v902 = vpop.permute.xlu0 %901
        %vm905 = vcmask 523520
        %906 = vst.msk [vmem:[%s136] sm:$0xff] %vm905, %v900
        %907 = vst.msk [vmem:[%s136 + $0x8] sm:$0xff] %vm905, %v902
        %s908 = sand.u32 %s71, 1
        %s909 = scalar_lea.sflag [#allocation3], %s908
        %s910 = sand.u32 %s71, 1
        %s911 = smul.addr %s910, 16
        %s912 = scalar_lea.vmem [#allocation2], %s911
        // Predicated region
        $region29: #{tpu_custom_call.1} parent=27 // pred_check
          %p913 = pneg %p81
        $region30: #{tpu_custom_call.1} parent=27 // pred_check_branch
          %915 = sbr.rel (%p913) target = $region32
        $region31: #{tpu_custom_call.1} parent=27 // pred_region
          %s917 = ssub.s32 256, 256
          %918 = vsyncadd %s909, %s917
          %s919 = smul.addr %s16, 2
          %s920 = smul.addr %s919, 128
          %s921 = scalar_lea.hbm %s2, %s920
          %s922 = sshll.u32 %s912, 4
          %s923 = int_to_ptr.vmem [resolvable:$true] %s922
          %928 = dma.vmem_to_hbm [thread:$0]  %s923, 256, %s921, %s909, 128, 128, 8
        $region32: #{tpu_custom_call.1} parent=27 // pred_fallthru
          _
      $region28: #{tpu_custom_call.1} parent=5 // pred_fallthru
        _
      %p929 = scmp.le.s32.totalorder 2, %s11
      // Predicated region
      $region33: #{tpu_custom_call.1} parent=5 // pred_check
        %p930 = pneg %p929
      $region34: #{tpu_custom_call.1} parent=5 // pred_check_branch
        %932 = sbr.rel (%p930) target = $region36
      $region35: #{tpu_custom_call.1} parent=5 // pred_region
        %s933 = ssub.s32 %s11, 2
        // Predicated region
        $region37: #{tpu_custom_call.1} parent=35 // pred_check
          %p934 = pneg %p87
        $region38: #{tpu_custom_call.1} parent=35 // pred_check_branch
          %936 = sbr.rel (%p934) target = $region40
        $region39: #{tpu_custom_call.1} parent=35 // pred_region
          %s937 = sand.u32 %s72, 1
          %s938 = scalar_lea.sflag [#allocation3], %s937
          %s939 = sand.u32 %s72, 1
          %s940 = smul.addr %s939, 16
          %s941 = scalar_lea.vmem [#allocation2], %s940
          %942 = dma.done %s938, 256
        $region40: #{tpu_custom_call.1} parent=35 // pred_fallthru
          _
      $region36: #{tpu_custom_call.1} parent=5 // pred_fallthru
        _
    $region6: #{tpu_custom_call.1} parent=1 // loop_footer
      %s15 = sadd.s32 1, %s11
    $region7: #{tpu_custom_call.1} parent=1 // loop_footer_branch
      %10 = sbr.rel target = $region3
    $region8: #{tpu_custom_call.1} parent=1 // loop_exit
      _
    %943 = vsyncpa [#allocation3], 1
    %s944 = scalar_lea.sflag [#allocation3], 1
    %945 = vsyncpa %s944, 1

</llo_original>
